<compile_context>
chip_gen: v5e
topology: v5e:2x2
jax: 0.10.0
libtpu: 0.0.40
codegen_flags: <defaults>
</compile_context>

<pallas_src>
import functools

import numpy as np
import jax
import jax.numpy as jnp
from jax.experimental import pallas as pl
from jax.experimental.pallas import tpu as pltpu


def _round_up(n, m):
    return ((n + m - 1) // m) * m


def _length_regulator_kernel(sb_ref, x_ref, cume_ref, cumi_ref, out_ref, *,
                             precision):
    # sb_ref:   (B*NLT,) int32 SMEM  - start token-block per (b, l-tile); only
    #                                  used by the index_maps.
    # x_ref:    (1, TKB, Dp)         - one token slab (resident / windowed).
    # cume_ref: (1, 1, TKB) int32    - exclusive cumsum of clamped durations.
    # cumi_ref: (1, 1, TKB) int32    - inclusive cumsum of clamped durations.
    # out_ref:  (1, TL, Dp)          - one L-tile of the output (revisited
    #                                  across the inner token-slab axis k).
    del sb_ref
    TKB = x_ref.shape[1]
    TL = out_ref.shape[1]
    k = pl.program_id(2)
    l_off = pl.program_id(1) * TL

    x = x_ref[0]                                   # (TKB, Dp)

    # Fold the frame offset of this L-tile into the (1, TKB) cum vectors
    # instead of adding it to the (TL, TKB) iota (saves a full VALU pass).
    ce = cume_ref[0] - l_off                       # (1, TKB) int32
    ci = cumi_ref[0] - l_off                       # (1, TKB) int32

    # Local frame j is produced by token t iff ce[t] <= j < ci[t].
    # Padded / zero-duration tokens have empty intervals; frames past the total
    # duration match nothing -> zero padding falls out for free.
    frame = jax.lax.broadcasted_iota(jnp.int32, (TL, TKB), 0)
    onehot = ((ce <= frame) & (frame < ci)).astype(x.dtype)   # (TL, TKB)

    # Gather == one-hot matmul on the MXU. Precision pinned explicitly so f32
    # frames are copied (effectively) bit-exactly.
    partial = jnp.dot(onehot, x, preferred_element_type=jnp.float32,
                      precision=precision)                    # (TL, Dp) f32

    @pl.when(k == 0)
    def _():
        out_ref[0] = partial.astype(out_ref.dtype)

    @pl.when(k > 0)
    def _():
        # Contributions from the two token slabs are frame-disjoint, so direct
        # accumulation in the output dtype is exact.
        out_ref[0] = out_ref[0] + partial.astype(out_ref.dtype)


def _pick_l_tile(L):
    # Largest MXU-friendly frame tile whose padding waste stays <= 25%.
    for tl in (512, 256):
        lp = _round_up(L, tl)
        if lp - L <= lp // 4:
            return tl
    return 128


def length_regulator(x, duration, max_len):
    """x: (B, T, D) float, duration: (B, T) int/float, max_len: static int.

    Returns (output (B, max_len, D), mel_len (B,) int32)."""
    # TODO(synk): the torch module also supports max_len=None (pad to the max
    # expanded length in the batch); that data-dependent output shape has no
    # static-shape Pallas equivalent, so max_len must be given here.
    B, T, D = x.shape
    L = int(max_len)

    TL = _pick_l_tile(L)
    L_pad = _round_up(L, TL)
    NLT = L_pad // TL

    # Clamp durations (torch reference: max(int(d), 0)).
    dur = jnp.maximum(duration.astype(jnp.int32), 0)              # (B, T)
    mel_len = jnp.sum(dur, axis=-1).astype(jnp.int32)             # (B,)

    # Token-windowing: a TL-frame output tile is fed by a contiguous run of at
    # most TL tokens *with nonzero duration*. Compact zero-duration tokens to
    # the back (stable among contributing tokens, so expansion order is kept),
    # then each grid step contracts only a TKB = TL token slab instead of all T.
    windowed = T > 2 * TL
    if windowed:
        t_idx = jnp.arange(T, dtype=jnp.int32)
        order = jnp.argsort(jnp.where(dur > 0, t_idx, t_idx + T), axis=-1)
        x_w = jnp.take_along_axis(x, order[:, :, None], axis=1)
        dur_w = jnp.take_along_axis(dur, order, axis=1)
        T_padX = _round_up(T, TL)
        TKB = TL        # token slab width per inner step
        W = 2           # two consecutive slabs always cover the needed run
    else:
        x_w, dur_w = x, dur
        T_padX = _round_up(T, 128)
        TKB = T_padX    # single slab == all (padded) tokens
        W = 1

    # Lane-dense hidden dim so output stores are unmasked full-lane vst.
    # NOTE: for D not already a multiple of 128 this pad (and the final slice)
    # costs an extra HBM pass; a consumer that accepts Dp-padded activations
    # can skip both.
    Dp = _round_up(D, 128)

    dur_p = jnp.pad(dur_w, ((0, 0), (0, T_padX - T)))
    x_p = jnp.pad(x_w, ((0, 0), (0, T_padX - T), (0, Dp - D)))

    cum_incl = jnp.cumsum(dur_p, axis=-1).astype(jnp.int32)       # (B, T_padX)
    cum_excl = (cum_incl - dur_p).astype(jnp.int32)               # (B, T_padX)

    if windowed:
        NSB = T_padX // TKB                                       # >= 3 here
        l_offs = jnp.arange(NLT, dtype=jnp.int32) * TL            # (NLT,)
        # First contributing token for each L-tile: count(cum_incl <= l_off).
        t_start = jnp.sum(
            (cum_incl[:, None, :] <= l_offs[None, :, None]).astype(jnp.int32),
            axis=-1)                                              # (B, NLT)
        sb = jnp.clip(t_start // TKB, 0, NSB - 2)                 # (B, NLT)
    else:
        sb = jnp.zeros((B, NLT), dtype=jnp.int32)
    sb_flat = sb.reshape(-1).astype(jnp.int32)                    # (B*NLT,)

    cum_incl3 = cum_incl.reshape(B, 1, T_padX)
    cum_excl3 = cum_excl.reshape(B, 1, T_padX)

    itm = x_p.dtype.itemsize
    # VMEM budget from actual block sizes (double-buffered x / out, cums,
    # onehot + frame temps) plus margin; clamped to stay portable on v7x.
    vmem_est = (2 * TKB * Dp * itm + 2 * TL * Dp * itm + 4 * TKB * 4
                + 4 * TL * TKB * 4 + (2 << 20))
    vmem_limit = int(min(max(vmem_est, 16 << 20), 64 << 20))

    flops = 2 * B * L_pad * W * TKB * Dp
    bytes_accessed = (B * NLT * W * TKB * Dp * itm        # x slabs
                      + B * L_pad * Dp * itm              # output
                      + 2 * B * NLT * W * TKB * 4)        # cum vectors
    cost = pl.CostEstimate(flops=int(flops), transcendentals=0,
                           bytes_accessed=int(bytes_accessed))

    # One-hot weights are exact in bf16, so a bf16 input runs the MXU at full
    # rate; for f32 inputs pin full precision so frames are copied exactly.
    prec = (jax.lax.Precision.HIGHEST if x_p.dtype == jnp.float32
            else jax.lax.Precision.DEFAULT)
    kernel = functools.partial(_length_regulator_kernel, precision=prec)

    grid = (B, NLT, W)

    out = pl.pallas_call(
        kernel,
        out_shape=jax.ShapeDtypeStruct((B, L_pad, Dp), x.dtype),
        grid_spec=pltpu.PrefetchScalarGridSpec(
            num_scalar_prefetch=1,
            grid=grid,
            in_specs=[
                pl.BlockSpec((1, TKB, Dp),
                             lambda b, l, k, sref: (b, sref[b * NLT + l] + k, 0)),
                pl.BlockSpec((1, 1, TKB),
                             lambda b, l, k, sref: (b, 0, sref[b * NLT + l] + k)),
                pl.BlockSpec((1, 1, TKB),
                             lambda b, l, k, sref: (b, 0, sref[b * NLT + l] + k)),
            ],
            out_specs=pl.BlockSpec((1, TL, Dp),
                                   lambda b, l, k, sref: (b, l, 0)),
        ),
        compiler_params=pltpu.CompilerParams(
            dimension_semantics=("parallel", "parallel", "arbitrary"),
            vmem_limit_bytes=vmem_limit),
        cost_estimate=cost,
    )(sb_flat, x_p, cum_excl3, cum_incl3)

    if L_pad != L or Dp != D:
        out = out[:, :L, :D]

    # mel_len is the full (unclamped) expanded length, like the torch reference
    # (its pad(..., max_len) truncates the frames but not the returned length).
    return out, mel_len


def _reference(x, duration, max_len):
    x = np.asarray(x)
    duration = np.asarray(duration)
    B, T, D = x.shape
    out = np.zeros((B, max_len, D), dtype=np.float32)
    lens = []
    for b in range(B):
        rows = []
        for t in range(T):
            r = max(int(duration[b, t]), 0)
            for _ in range(r):
                rows.append(x[b, t])
        lens.append(len(rows))
        if rows:
            rows = np.stack(rows, axis=0)
            n = min(rows.shape[0], max_len)
            out[b, :n] = rows[:n]
    return out, np.asarray(lens, dtype=np.int32)


def _check(B, T, D, max_len, dur_max, seed):
    key = jax.random.PRNGKey(seed)
    kx, kd = jax.random.split(key)
    x = jax.random.normal(kx, (B, T, D), dtype=jnp.float32)
    duration = jax.random.randint(kd, (B, T), minval=0, maxval=dur_max,
                                  dtype=jnp.int32)

    out, mel_len = length_regulator(x, duration, max_len)
    out = jax.block_until_ready(out)
    mel_len = jax.block_until_ready(mel_len)

    ref_out, ref_len = _reference(x, duration, max_len)
    assert out.shape == (B, max_len, D)
    assert np.allclose(np.asarray(out), ref_out, atol=1e-5), "output mismatch"
    assert np.array_equal(np.asarray(mel_len), ref_len), "mel_len mismatch"


if __name__ == "__main__":
    # Small non-windowed path (full-T contraction).
    _check(B=2, T=8, D=32, max_len=32, dur_max=4, seed=0)
    # Token-windowed path (T > 2*TL): compaction + scalar-prefetch slab indices
    # + two-slab accumulation, with truncation past max_len.
    _check(B=2, T=1200, D=16, max_len=1024, dur_max=3, seed=0)
    print("KERNEL_OK")
</pallas_src>

<mosaic_0001>
module attributes {stable_mosaic.version = 11 : i64} {
  func.func @_length_regulator_kernel(%arg0: i32, %arg1: i32, %arg2: i32, %arg3: memref<2xi32, #tpu.memory_space<smem>>, %arg4: memref<1x128x128xf32, #tpu.memory_space<vmem>>, %arg5: memref<1x1x128xi32, #tpu.memory_space<vmem>>, %arg6: memref<1x1x128xi32, #tpu.memory_space<vmem>>, %arg7: memref<1x128x128xf32, #tpu.memory_space<vmem>>) attributes {dimension_semantics = [#tpu.dimension_semantics<parallel>, #tpu.dimension_semantics<parallel>, #tpu.dimension_semantics<arbitrary>], iteration_bounds = array<i64: 2, 1, 1>, scalar_prefetch = 1 : i64, scratch_operands = 0 : i64, tpu.core_type = #tpu.core_type<tc>, window_params = [{transform_indices = @transform_0, window_bounds = array<i64: 1, 128, 128>}, {transform_indices = @transform_1, window_bounds = array<i64: 1, 1, 128>}, {transform_indices = @transform_2, window_bounds = array<i64: 1, 1, 128>}, {transform_indices = @transform_3, window_bounds = array<i64: 1, 128, 128>}]} {
    %c128_i32 = arith.constant 128 : i32
    %0 = arith.muli %arg1, %c128_i32 : i32
    %c0 = arith.constant 0 : index
    %c0_0 = arith.constant 0 : index
    %c0_1 = arith.constant 0 : index
    %1 = vector.load %arg4[%c0, %c0_0, %c0_1] : memref<1x128x128xf32, #tpu.memory_space<vmem>>, vector<1x128x128xf32>
    %2 = vector.shape_cast %1 : vector<1x128x128xf32> to vector<128x128xf32>
    %c0_2 = arith.constant 0 : index
    %c0_3 = arith.constant 0 : index
    %c0_4 = arith.constant 0 : index
    %3 = vector.load %arg5[%c0_2, %c0_3, %c0_4] : memref<1x1x128xi32, #tpu.memory_space<vmem>>, vector<1x1x128xi32>
    %4 = vector.shape_cast %3 : vector<1x1x128xi32> to vector<1x128xi32>
    %5 = vector.broadcast %0 : i32 to vector<1x128xi32>
    %6 = arith.subi %4, %5 : vector<1x128xi32>
    %c0_5 = arith.constant 0 : index
    %c0_6 = arith.constant 0 : index
    %c0_7 = arith.constant 0 : index
    %7 = vector.load %arg6[%c0_5, %c0_6, %c0_7] : memref<1x1x128xi32, #tpu.memory_space<vmem>>, vector<1x1x128xi32>
    %8 = vector.shape_cast %7 : vector<1x1x128xi32> to vector<1x128xi32>
    %9 = vector.broadcast %0 : i32 to vector<1x128xi32>
    %10 = arith.subi %8, %9 : vector<1x128xi32>
    %11 = tpu.iota {dimensions = array<i32: 0>} : vector<128x128xi32>
    %12 = vector.broadcast %6 : vector<1x128xi32> to vector<128x128xi32>
    %13 = arith.cmpi sle, %12, %11 : vector<128x128xi32>
    %14 = vector.broadcast %10 : vector<1x128xi32> to vector<128x128xi32>
    %15 = arith.cmpi slt, %11, %14 : vector<128x128xi32>
    %16 = arith.andi %13, %15 : vector<128x128xi1>
    %17 = arith.extui %16 : vector<128x128xi1> to vector<128x128xi32>
    %18 = arith.sitofp %17 : vector<128x128xi32> to vector<128x128xf32>
    %cst = arith.constant dense<0.000000e+00> : vector<128x128xf32>
    %19 = tpu.matmul %18, %2, %cst {dimension_numbers = #tpu.dot_dimension_numbers<[1], [0], [0], [1], [0, 0, 1, 1], [], []>, precision = #tpu.contract_precision<fp32>} : vector<128x128xf32>, vector<128x128xf32>, vector<128x128xf32> -> vector<128x128xf32>
    %c0_i32 = arith.constant 0 : i32
    %20 = arith.cmpi eq, %arg2, %c0_i32 : i32
    %21 = arith.extui %20 : i1 to i32
    %c0_i32_8 = arith.constant 0 : i32
    %22 = arith.cmpi ne, %21, %c0_i32_8 : i32
    scf.if %22 {
      %c0_11 = arith.constant 0 : index
      %c0_12 = arith.constant 0 : index
      %c0_13 = arith.constant 0 : index
      %26 = vector.load %arg7[%c0_11, %c0_12, %c0_13] : memref<1x128x128xf32, #tpu.memory_space<vmem>>, vector<1x128x128xf32>
      %27 = vector.shape_cast %26 : vector<1x128x128xf32> to vector<128x128xf32>
      %28 = vector.shape_cast %19 : vector<128x128xf32> to vector<1x128x128xf32>
      tpu.vector_store %arg7[%c0_11, %c0_12, %c0_13], %28 {strides = array<i32>} : memref<1x128x128xf32, #tpu.memory_space<vmem>>, vector<1x128x128xf32>,
    } else {
    }
    %c0_i32_9 = arith.constant 0 : i32
    %23 = arith.cmpi sgt, %arg2, %c0_i32_9 : i32
    %24 = arith.extui %23 : i1 to i32
    %c0_i32_10 = arith.constant 0 : i32
    %25 = arith.cmpi ne, %24, %c0_i32_10 : i32
    scf.if %25 {
      %c0_11 = arith.constant 0 : index
      %c0_12 = arith.constant 0 : index
      %c0_13 = arith.constant 0 : index
      %26 = vector.load %arg7[%c0_11, %c0_12, %c0_13] : memref<1x128x128xf32, #tpu.memory_space<vmem>>, vector<1x128x128xf32>
      %27 = vector.shape_cast %26 : vector<1x128x128xf32> to vector<128x128xf32>
      %28 = arith.addf %27, %19 : vector<128x128xf32>
      %c0_14 = arith.constant 0 : index
      %c0_15 = arith.constant 0 : index
      %c0_16 = arith.constant 0 : index
      %29 = vector.load %arg7[%c0_14, %c0_15, %c0_16] : memref<1x128x128xf32, #tpu.memory_space<vmem>>, vector<1x128x128xf32>
      %30 = vector.shape_cast %29 : vector<1x128x128xf32> to vector<128x128xf32>
      %31 = vector.shape_cast %28 : vector<128x128xf32> to vector<1x128x128xf32>
      tpu.vector_store %arg7[%c0_14, %c0_15, %c0_16], %31 {strides = array<i32>} : memref<1x128x128xf32, #tpu.memory_space<vmem>>, vector<1x128x128xf32>,
    } else {
    }
    return
  }
  func.func @transform_0(%arg0: i32, %arg1: i32, %arg2: i32, %arg3: memref<2xi32, #tpu.memory_space<smem>>) -> (i32, i32, i32) {
    %c1_i32 = arith.constant 1 : i32
    %0 = arith.muli %arg0, %c1_i32 : i32
    %1 = arith.addi %0, %arg1 : i32
    %2 = arith.index_cast %1 : i32 to index
    %3 = memref.load %arg3[%2] : memref<2xi32, #tpu.memory_space<smem>>
    %4 = arith.addi %3, %arg2 : i32
    %c0_i32 = arith.constant 0 : i32
    %c0_i32_0 = arith.constant 0 : i32
    return %arg0, %4, %c0_i32 : i32, i32, i32
  }
  func.func @transform_1(%arg0: i32, %arg1: i32, %arg2: i32, %arg3: memref<2xi32, #tpu.memory_space<smem>>) -> (i32, i32, i32) {
    %c1_i32 = arith.constant 1 : i32
    %0 = arith.muli %arg0, %c1_i32 : i32
    %1 = arith.addi %0, %arg1 : i32
    %2 = arith.index_cast %1 : i32 to index
    %3 = memref.load %arg3[%2] : memref<2xi32, #tpu.memory_space<smem>>
    %4 = arith.addi %3, %arg2 : i32
    %c0_i32 = arith.constant 0 : i32
    %c0_i32_0 = arith.constant 0 : i32
    return %arg0, %c0_i32, %4 : i32, i32, i32
  }
  func.func @transform_2(%arg0: i32, %arg1: i32, %arg2: i32, %arg3: memref<2xi32, #tpu.memory_space<smem>>) -> (i32, i32, i32) {
    %c1_i32 = arith.constant 1 : i32
    %0 = arith.muli %arg0, %c1_i32 : i32
    %1 = arith.addi %0, %arg1 : i32
    %2 = arith.index_cast %1 : i32 to index
    %3 = memref.load %arg3[%2] : memref<2xi32, #tpu.memory_space<smem>>
    %4 = arith.addi %3, %arg2 : i32
    %c0_i32 = arith.constant 0 : i32
    %c0_i32_0 = arith.constant 0 : i32
    return %arg0, %c0_i32, %4 : i32, i32, i32
  }
  func.func @transform_3(%arg0: i32, %arg1: i32, %arg2: i32, %arg3: memref<2xi32, #tpu.memory_space<smem>>) -> (i32, i32, i32) {
    %c0_i32 = arith.constant 0 : i32
    %c0_i32_0 = arith.constant 0 : i32
    return %arg0, %arg1, %c0_i32 : i32, i32, i32
  }
}

</mosaic_0001>

<llo_original>
// kernel: tpu_custom_call.1
$region0: #{tpu_custom_call.1}
  #allocation0 [shape = 'u32[]', space=smem, size = 0x4, offset = 0x4, fixed_abs, tag = 'smem constant byte address 0x4 - core index']
  #allocation1 [shape = 'u32[72,128]{1,0:T(1,128)}', space=vmem, size = 0x9000, scoped, tag = 'internal scratch']
  #allocation2 [shape = 's32[1]{0}', space=sflag, size = 0x4, scoped, tag = 'scoped memory for tpu_custom_call.1']
  #allocation3 [shape = 'u8[512]{0}', space=smem, size = 0x200, scoped, tag = 'prefetched SMEM operand 0']
  %s0 = inlined_call_operand.hbm [shape: s32[2], index: 0, kind: input, shape index: {}]
  %s1 = inlined_call_operand.hbm [shape: f32[2,128,128], index: 1, kind: input, shape index: {}]
  %s2 = inlined_call_operand.hbm [shape: s32[2,1,128], index: 2, kind: input, shape index: {}]
  %s3 = inlined_call_operand.vmem [shape: s32[2,1,128], index: 3, kind: input, shape index: {}]
  %s4 = inlined_call_operand.hbm [shape: f32[2,128,128], index: 4, kind: output, shape index: {}]
  %s5 = sld [smem:[#allocation0]]
  $region61: #{tpu_custom_call.1} parent=0
    _
  %s7 = ssub.s32 1, %s5
  %s8 = scalar_select 0, %s7, %s5
  %s10 = sshll.u32 %s0, 4
  %s11 = int_to_ptr.hbm [resolvable:$true] %s10
  %13 = dma.hbm_to_smem %s11, 16, [#allocation3], [#allocation2]
  %15 = dma.done [#allocation2], 16
  %16 = sfence
  $region1: #{tpu_custom_call.1} parent=0
    #allocation4 [shape = 'u8[131072]{0}', space=vmem, size = 0x20000, scoped, tag = 'input window, operand 1']
    #allocation5 [shape = 's32[2]{0}', space=sflag, size = 0x8, scoped, tag = 'scoped memory for tpu_custom_call.1']
    #allocation6 [shape = 's32[2]{0}', space=sflag, size = 0x8, scoped, tag = 'scoped memory for tpu_custom_call.1']
    #allocation7 [shape = 'u8[1024]{0}', space=vmem, size = 0x400, scoped, tag = 'input window, operand 2']
    #allocation8 [shape = 's32[2]{0}', space=sflag, size = 0x8, scoped, tag = 'scoped memory for tpu_custom_call.1']
    #allocation9 [shape = 'u8[131072]{0}', space=vmem, size = 0x20000, scoped, tag = 'output window, operand 0']
    %17 = vsyncpa [#allocation5], 0
    %s18 = scalar_lea.sflag [#allocation5], 1
    %19 = vsyncpa %s18, 0
    %20 = vsyncpa [#allocation8], 0
    %s21 = scalar_lea.sflag [#allocation8], 1
    %22 = vsyncpa %s21, 0
    %23 = vsyncpa [#allocation6], 0
    %s24 = scalar_lea.sflag [#allocation6], 1
    %25 = vsyncpa %s24, 0
    loop: start=0, step=1, limit=4
    $region2: #{tpu_custom_call.1} parent=1 // loop_pre_header
      _
    $region3: #{tpu_custom_call.1} parent=1 // loop_header
      %s27 = sphi 0, %s31
      %p28 = scmp.ge.s32.totalorder %s27, 4
      %s34 = sphi 0, %s53
      %s35 = sphi 0, %s49
      %s36 = sphi 0, %s45
      %s37 = sphi 0, %s34
      %s38 = sphi 0, %s35
      %s39 = sphi 0, %s36
      %s40 = sphi 0, %s37
      %s41 = sphi 0, %s38
      %s42 = sphi 0, %s39
      %s64 = sphi 0, %s66
      %s67 = sphi 0, %s64
      %s68 = sphi 0, %s67
      %s84 = sphi 0, %s68
      %s98 = sphi 0, %s100
      %s101 = sphi 0, %s98
      %s102 = sphi 0, %s101
      %s118 = sphi 0, %s102
      %s132 = sphi 0, %s134
      %s135 = sphi 0, %s132
      %s136 = sphi 0, %s135
      %s152 = sphi 0, %s136
      %s160 = sphi 0, %s162
      %s163 = sphi 0, %s160
      %s164 = sphi 0, %s163
      %s180 = sphi 0, %s164
    $region4: #{tpu_custom_call.1} parent=1 // loop_header_branch
      %30 = sbr.rel (%p28) target = $region8
    $region5: #{tpu_custom_call.1} parent=1 // loop_body
      %s32 = ssub.s32 %s27, 1
      %s33 = ssub.s32 %s27, 2
      %s43 = sadd.s32 1, %s36
      %p44 = scmp.ge.s32.totalorder %s43, 1
      %s45 = scalar_select %p44, 0, %s43
      %s46 = sadd.s32 1, %s35
      %s47 = scalar_select %p44, %s46, %s35
      %p48 = scmp.ge.s32.totalorder %s47, 1
      %s49 = scalar_select %p48, 0, %s47
      %s50 = sadd.s32 1, %s34
      %s51 = scalar_select %p48, %s50, %s34
      %p52 = scmp.ge.s32.totalorder %s51, 2
      %s53 = scalar_select %p52, 0, %s51
      %s54 = sadd.s32 %s34, %s35
      %s55 = sld [smem:[#allocation3 + %s54]]
      %s56 = sadd.s32 %s55, %s36
      %s57 = sadd.s32 %s53, %s49
      %s58 = sld [smem:[#allocation3 + %s57]]
      %s59 = sadd.s32 %s58, %s45
      %s60 = ssub.s32 %s34, %s53
      %s61 = ssub.s32 %s56, %s59
      %s62 = sor.u32 %s60, %s61
      %p63 = scmp.eq.s32.totalorder %s62, 0
      %s65 = sadd.s32 %s64, 1
      %s66 = scalar_select %p63, %s64, %s65
      %p69 = pneg %p63
      %p70 = scmp.eq.s32.totalorder %s27, 1
      %p71 = por %p69, %p70
      %p72 = scmp.ne.s32.totalorder %s64, %s67
      %p73 = scmp.eq.s32.totalorder %s27, 0
      %p74 = por %p72, %p73
      %p75 = scmp.ne.s32.totalorder %s64, %s67
      %p76 = scmp.eq.s32.totalorder %s32, 1
      %p77 = por %p75, %p76
      %p78 = scmp.ne.s32.totalorder %s67, %s68
      %p79 = scmp.eq.s32.totalorder %s32, 0
      %p80 = por %p78, %p79
      %p81 = scmp.ne.s32.totalorder %s67, %s68
      %p82 = scmp.eq.s32.totalorder %s33, 1
      %p83 = por %p81, %p82
      %p85 = scmp.ne.s32.totalorder %s68, %s84
      %p86 = scmp.eq.s32.totalorder %s33, 0
      %p87 = por %p85, %p86
      %s88 = sadd.s32 %s34, %s35
      %s89 = sld [smem:[#allocation3 + %s88]]
      %s90 = sadd.s32 %s89, %s36
      %s91 = sadd.s32 %s53, %s49
      %s92 = sld [smem:[#allocation3 + %s91]]
      %s93 = sadd.s32 %s92, %s45
      %s94 = ssub.s32 %s34, %s53
      %s95 = ssub.s32 %s90, %s93
      %s96 = sor.u32 %s94, %s95
      %p97 = scmp.eq.s32.totalorder %s96, 0
      %s99 = sadd.s32 %s98, 1
      %s100 = scalar_select %p97, %s98, %s99
      %p103 = pneg %p97
      %p104 = scmp.eq.s32.totalorder %s27, 1
      %p105 = por %p103, %p104
      %p106 = scmp.ne.s32.totalorder %s98, %s101
      %p107 = scmp.eq.s32.totalorder %s27, 0
      %p108 = por %p106, %p107
      %p109 = scmp.ne.s32.totalorder %s98, %s101
      %p110 = scmp.eq.s32.totalorder %s32, 1
      %p111 = por %p109, %p110
      %p112 = scmp.ne.s32.totalorder %s101, %s102
      %p113 = scmp.eq.s32.totalorder %s32, 0
      %p114 = por %p112, %p113
      %p115 = scmp.ne.s32.totalorder %s101, %s102
      %p116 = scmp.eq.s32.totalorder %s33, 1
      %p117 = por %p115, %p116
      %p119 = scmp.ne.s32.totalorder %s102, %s118
      %p120 = scmp.eq.s32.totalorder %s33, 0
      %p121 = por %p119, %p120
      %s122 = sadd.s32 %s34, %s35
      %s123 = sld [smem:[#allocation3 + %s122]]
      %s124 = sadd.s32 %s123, %s36
      %s125 = sadd.s32 %s53, %s49
      %s126 = sld [smem:[#allocation3 + %s125]]
      %s127 = sadd.s32 %s126, %s45
      %s128 = ssub.s32 %s34, %s53
      %s129 = ssub.s32 %s124, %s127
      %s130 = sor.u32 %s128, %s129
      %p131 = scmp.eq.s32.totalorder %s130, 0
      %s133 = sadd.s32 %s132, 1
      %s134 = scalar_select %p131, %s132, %s133
      %p137 = pneg %p131
      %p138 = scmp.eq.s32.totalorder %s27, 1
      %p139 = por %p137, %p138
      %p140 = scmp.ne.s32.totalorder %s132, %s135
      %p141 = scmp.eq.s32.totalorder %s27, 0
      %p142 = por %p140, %p141
      %p143 = scmp.ne.s32.totalorder %s132, %s135
      %p144 = scmp.eq.s32.totalorder %s32, 1
      %p145 = por %p143, %p144
      %p146 = scmp.ne.s32.totalorder %s135, %s136
      %p147 = scmp.eq.s32.totalorder %s32, 0
      %p148 = por %p146, %p147
      %p149 = scmp.ne.s32.totalorder %s135, %s136
      %p150 = scmp.eq.s32.totalorder %s33, 1
      %p151 = por %p149, %p150
      %p153 = scmp.ne.s32.totalorder %s136, %s152
      %p154 = scmp.eq.s32.totalorder %s33, 0
      %p155 = por %p153, %p154
      %s156 = ssub.s32 %s34, %s53
      %s157 = ssub.s32 %s35, %s49
      %s158 = sor.u32 %s156, %s157
      %p159 = scmp.eq.s32.totalorder %s158, 0
      %s161 = sadd.s32 %s160, 1
      %s162 = scalar_select %p159, %s160, %s161
      %p165 = pneg %p159
      %p166 = scmp.eq.s32.totalorder %s27, 1
      %p167 = por %p165, %p166
      %p168 = scmp.ne.s32.totalorder %s160, %s163
      %p169 = scmp.eq.s32.totalorder %s27, 0
      %p170 = por %p168, %p169
      %p171 = scmp.ne.s32.totalorder %s160, %s163
      %p172 = scmp.eq.s32.totalorder %s32, 1
      %p173 = por %p171, %p172
      %p174 = scmp.ne.s32.totalorder %s163, %s164
      %p175 = scmp.eq.s32.totalorder %s32, 0
      %p176 = por %p174, %p175
      %p177 = scmp.ne.s32.totalorder %s163, %s164
      %p178 = scmp.eq.s32.totalorder %s33, 1
      %p179 = por %p177, %p178
      %p181 = scmp.ne.s32.totalorder %s164, %s180
      %p182 = scmp.eq.s32.totalorder %s33, 0
      %p183 = por %p181, %p182
      %p184 = scmp.le.s32.totalorder 1, %s27
      %p185 = scmp.lt.s32.totalorder %s27, 3
      %p186 = pnand %p184, %p185
      %p187 = pneg %p186
      // Predicated region
      $region9: #{tpu_custom_call.1} parent=5 // pred_check
        _
      $region10: #{tpu_custom_call.1} parent=5 // pred_check_branch
        %189 = sbr.rel (%p186) target = $region12
      $region11: #{tpu_custom_call.1} parent=5 // pred_region
        %s190 = ssub.s32 %s27, 1
      $region12: #{tpu_custom_call.1} parent=5 // pred_fallthru
        _
      %p191 = scmp.lt.s32.totalorder %s27, 2
      // Predicated region
      $region13: #{tpu_custom_call.1} parent=5 // pred_check
        %p192 = pneg %p191
      $region14: #{tpu_custom_call.1} parent=5 // pred_check_branch
        %194 = sbr.rel (%p192) target = $region16
      $region15: #{tpu_custom_call.1} parent=5 // pred_region
        // Predicated region
        $region17: #{tpu_custom_call.1} parent=15 // pred_check
          %p195 = pneg %p74
        $region18: #{tpu_custom_call.1} parent=15 // pred_check_branch
          %197 = sbr.rel (%p195) target = $region20
        $region19: #{tpu_custom_call.1} parent=15 // pred_region
          %s198 = sand.u32 %s64, 1
          %s199 = scalar_lea.sflag [#allocation5], %s198
          %s200 = sand.u32 %s64, 1
          %s201 = smul.addr %s200, 128
          %s202 = scalar_lea.vmem [#allocation4], %s201
          %s203 = sadd.s32 %s34, %s35
          %s204 = sld [smem:[#allocation3 + %s203]]
          %s205 = sadd.s32 %s204, %s36
          %s206 = smul.u32 16, %s205
          %208 = vsyncadd %s199, 0
          %s209 = smul.addr %s34, 16
          %s210 = sadd.s32 %s206, %s209
          %s211 = smul.addr %s210, 8
          %s212 = scalar_lea.hbm %s1, %s211
          %s213 = sshll.u32 %s212, 4
          %s214 = int_to_ptr.hbm [resolvable:$true] %s213
          %s215 = sshll.u32 %s202, 4
          %s216 = int_to_ptr.vmem [resolvable:$true] %s215
          %221 = dma.hbm_to_vmem [thread:$0]  %s214, 2048, %s216, %s199, 128, 128, 8
        $region20: #{tpu_custom_call.1} parent=15 // pred_fallthru
          _
        // Predicated region
        $region21: #{tpu_custom_call.1} parent=15 // pred_check
          %p222 = pneg %p108
        $region22: #{tpu_custom_call.1} parent=15 // pred_check_branch
          %224 = sbr.rel (%p222) target = $region24
        $region23: #{tpu_custom_call.1} parent=15 // pred_region
          %s225 = sand.u32 %s98, 1
          %s226 = scalar_lea.sflag [#allocation8], %s225
          %s227 = sand.u32 %s98, 1
          %s228 = scalar_lea.vmem [#allocation7], %s227
          %s229 = sadd.s32 %s34, %s35
          %s230 = sld [smem:[#allocation3 + %s229]]
          %s231 = sadd.s32 %s230, %s36
          %233 = vsyncadd %s226, 0
          %s234 = sadd.s32 %s231, %s34
          %s235 = scalar_lea.hbm %s2, %s234
          %s237 = sshll.u32 %s235, 4
          %s238 = int_to_ptr.hbm [resolvable:$true] %s237
          %s239 = sshll.u32 %s228, 4
          %s240 = int_to_ptr.vmem [resolvable:$true] %s239
          %242 = dma.hbm_to_vmem [thread:$0]  %s238, 16, %s240, %s226
        $region24: #{tpu_custom_call.1} parent=15 // pred_fallthru
          _
        // Predicated region
        $region25: #{tpu_custom_call.1} parent=15 // pred_check
          %p243 = pneg %p142
        $region26: #{tpu_custom_call.1} parent=15 // pred_check_branch
          %245 = sbr.rel (%p243) target = $region28
        $region27: #{tpu_custom_call.1} parent=15 // pred_region
          %s246 = sadd.s32 %s34, %s35
          %s247 = sld [smem:[#allocation3 + %s246]]
          %s248 = sadd.s32 %s247, %s36
          %p249 = scmp.lt.s32.totalorder %s34, 1
          %s250 = scalar_select %p249, %s34, 1
          %p251 = scmp.lt.s32.totalorder %s248, 0
          %s252 = scalar_select %p251, %s248, 0
          %s253 = sadd.s32 %s252, %s250
          %s254 = scalar_lea.vmem %s3, %s253
          %s255 = sadd.s32 %s34, %s35
          %s256 = sld [smem:[#allocation3 + %s255]]
          %s257 = sadd.s32 %s256, %s36
        $region28: #{tpu_custom_call.1} parent=15 // pred_fallthru
          _
      $region16: #{tpu_custom_call.1} parent=5 // pred_fallthru
        _
      %p258 = scmp.le.s32.totalorder 1, %s27
      %p259 = scmp.lt.s32.totalorder %s27, 3
      %p260 = pnand %p258, %p259
      %p261 = pneg %p260
      // Predicated region
      $region29: #{tpu_custom_call.1} parent=5 // pred_check
        _
      $region30: #{tpu_custom_call.1} parent=5 // pred_check_branch
        %263 = sbr.rel (%p260) target = $region32
      $region31: #{tpu_custom_call.1} parent=5 // pred_region
        %s264 = ssub.s32 %s27, 1
        %s265 = sand.u32 %s67, 1
        %s266 = scalar_lea.sflag [#allocation5], %s265
        %s267 = sand.u32 %s67, 1
        %s268 = smul.addr %s267, 128
        %s269 = scalar_lea.vmem [#allocation4], %s268
        // Predicated region
        $region33: #{tpu_custom_call.1} parent=31 // pred_check
          %p270 = pneg %p80
        $region34: #{tpu_custom_call.1} parent=31 // pred_check_branch
          %272 = sbr.rel (%p270) target = $region36
        $region35: #{tpu_custom_call.1} parent=31 // pred_region
          %274 = dma.done %s266, 2048
        $region36: #{tpu_custom_call.1} parent=31 // pred_fallthru
          _
        %s275 = sand.u32 %s101, 1
        %s276 = scalar_lea.sflag [#allocation8], %s275
        %s277 = sand.u32 %s101, 1
        %s278 = scalar_lea.vmem [#allocation7], %s277
        // Predicated region
        $region37: #{tpu_custom_call.1} parent=31 // pred_check
          %p279 = pneg %p114
        $region38: #{tpu_custom_call.1} parent=31 // pred_check_branch
          %281 = sbr.rel (%p279) target = $region40
        $region39: #{tpu_custom_call.1} parent=31 // pred_region
          %283 = dma.done %s276, 16
        $region40: #{tpu_custom_call.1} parent=31 // pred_fallthru
          _
        %s284 = sand.u32 %s67, 1
        %s285 = scalar_lea.sflag [#allocation5], %s284
        %s286 = sand.u32 %s67, 1
        %s287 = smul.addr %s286, 128
        %s288 = scalar_lea.vmem [#allocation4], %s287
        %p289 = pneg %p80
        %p290 = pneg %p77
        %s291 = sand.u32 %s101, 1
        %s292 = scalar_lea.sflag [#allocation8], %s291
        %s293 = sand.u32 %s101, 1
        %s294 = scalar_lea.vmem [#allocation7], %s293
        %p295 = pneg %p114
        %p296 = pneg %p111
        %s297 = sadd.s32 %s37, %s38
        %s298 = sld [smem:[#allocation3 + %s297]]
        %s299 = sadd.s32 %s298, %s39
        %p300 = scmp.lt.s32.totalorder %s37, 1
        %s301 = scalar_select %p300, %s37, 1
        %p302 = scmp.lt.s32.totalorder %s299, 0
        %s303 = scalar_select %p302, %s299, 0
        %s304 = sadd.s32 %s303, %s301
        %s305 = scalar_lea.vmem %s3, %s304
        %p306 = pneg %p148
        %p307 = pneg %p145
        %p308 = pneg %p176
        %p309 = pneg %p173
        %s310 = sand.u32 %s163, 1
        %s311 = scalar_lea.sflag [#allocation6], %s310
        %s312 = sand.u32 %s163, 1
        %s313 = smul.addr %s312, 128
        %s314 = scalar_lea.vmem [#allocation9], %s313
        %s315 = sadd.s32 %s37, %s38
        %s316 = sld [smem:[#allocation3 + %s315]]
        %s317 = sadd.s32 %s316, %s39
        %s318 = smul.u32 16, %s317
        %s319 = sadd.s32 %s37, %s38
        %s320 = sld [smem:[#allocation3 + %s319]]
        %s321 = sadd.s32 %s320, %s39
        %s322 = sadd.s32 %s37, %s38
        %s323 = sld [smem:[#allocation3 + %s322]]
        %s324 = sadd.s32 %s323, %s39
        %p325 = scmp.lt.s32.totalorder %s37, 1
        %s326 = scalar_select %p325, %s37, 1
        %p327 = scmp.lt.s32.totalorder %s324, 0
        %s328 = scalar_select %p327, %s324, 0
        %s329 = sadd.s32 %s328, %s326
        %s330 = scalar_lea.vmem %s3, %s329
        %s331 = sadd.s32 %s37, %s38
        %s332 = sld [smem:[#allocation3 + %s331]]
        %s333 = sadd.s32 %s332, %s39
        %s334 = smul.u32 16, %s38
        %s335 = smul.u32 %s38, 128
        %v336 = vld [vmem:[%s269] sm:$0xff]
        %v337 = vld [vmem:[%s269 + $0x8] sm:$0xff]
        %v338 = vld [vmem:[%s269 + $0x10] sm:$0xff]
        %v339 = vld [vmem:[%s269 + $0x18] sm:$0xff]
        %v340 = vld [vmem:[%s269 + $0x20] sm:$0xff]
        %v341 = vld [vmem:[%s269 + $0x28] sm:$0xff]
        %v342 = vld [vmem:[%s269 + $0x30] sm:$0xff]
        %v343 = vld [vmem:[%s269 + $0x38] sm:$0xff]
        %v344 = vld [vmem:[%s269 + $0x40] sm:$0xff]
        %v345 = vld [vmem:[%s269 + $0x48] sm:$0xff]
        %v346 = vld [vmem:[%s269 + $0x50] sm:$0xff]
        %v347 = vld [vmem:[%s269 + $0x58] sm:$0xff]
        %v348 = vld [vmem:[%s269 + $0x60] sm:$0xff]
        %v349 = vld [vmem:[%s269 + $0x68] sm:$0xff]
        %v350 = vld [vmem:[%s269 + $0x70] sm:$0xff]
        %v351 = vld [vmem:[%s269 + $0x78] sm:$0xff]
        %v352 = vld [vmem:[%s278] sm:$0x1]
        %v353 = vstv %s335
        %v354 = vsub.s32 %v352, %v353
        %v355 = vld [vmem:[%s330] sm:$0x1]
        %v356 = vsub.s32 %v355, %v353
        %v357 = vlaneseq
        %v358 = vshrl.u32 %v357, 7
        %v359 = vadd.s32 %v358, 8
        %v360 = vadd.s32 %v358, 16
        %v361 = vadd.s32 %v358, 24
        %v362 = vadd.s32 %v358, 32
        %v363 = vadd.s32 %v358, 40
        %v364 = vadd.s32 %v358, 48
        %v365 = vadd.s32 %v358, 56
        %v366 = vadd.s32 %v358, 64
        %v367 = vadd.s32 %v358, 72
        %v368 = vadd.s32 %v358, 80
        %v369 = vadd.s32 %v358, 88
        %v370 = vadd.s32 %v358, 96
        %v371 = vadd.s32 %v358, 104
        %v372 = vadd.s32 %v358, 112
        %v373 = vadd.s32 %v358, 120
        %v374 = vperm.slane %v354, 0
        %vm375 = vcmp.le.s32.totalorder %v374, %v358
        %vm376 = vcmp.le.s32.totalorder %v374, %v359
        %vm377 = vcmp.le.s32.totalorder %v374, %v360
        %vm378 = vcmp.le.s32.totalorder %v374, %v361
        %vm379 = vcmp.le.s32.totalorder %v374, %v362
        %vm380 = vcmp.le.s32.totalorder %v374, %v363
        %vm381 = vcmp.le.s32.totalorder %v374, %v364
        %vm382 = vcmp.le.s32.totalorder %v374, %v365
        %vm383 = vcmp.le.s32.totalorder %v374, %v366
        %vm384 = vcmp.le.s32.totalorder %v374, %v367
        %vm385 = vcmp.le.s32.totalorder %v374, %v368
        %vm386 = vcmp.le.s32.totalorder %v374, %v369
        %vm387 = vcmp.le.s32.totalorder %v374, %v370
        %vm388 = vcmp.le.s32.totalorder %v374, %v371
        %vm389 = vcmp.le.s32.totalorder %v374, %v372
        %vm390 = vcmp.le.s32.totalorder %v374, %v373
        %v391 = vperm.slane %v356, 0
        %vm392 = vcmp.lt.s32.totalorder %v358, %v391
        %vm393 = vcmp.lt.s32.totalorder %v359, %v391
        %vm394 = vcmp.lt.s32.totalorder %v360, %v391
        %vm395 = vcmp.lt.s32.totalorder %v361, %v391
        %vm396 = vcmp.lt.s32.totalorder %v362, %v391
        %vm397 = vcmp.lt.s32.totalorder %v363, %v391
        %vm398 = vcmp.lt.s32.totalorder %v364, %v391
        %vm399 = vcmp.lt.s32.totalorder %v365, %v391
        %vm400 = vcmp.lt.s32.totalorder %v366, %v391
        %vm401 = vcmp.lt.s32.totalorder %v367, %v391
        %vm402 = vcmp.lt.s32.totalorder %v368, %v391
        %vm403 = vcmp.lt.s32.totalorder %v369, %v391
        %vm404 = vcmp.lt.s32.totalorder %v370, %v391
        %vm405 = vcmp.lt.s32.totalorder %v371, %v391
        %vm406 = vcmp.lt.s32.totalorder %v372, %v391
        %vm407 = vcmp.lt.s32.totalorder %v373, %v391
        %vm408 = vmand %vm375, %vm392
        %vm409 = vmand %vm376, %vm393
        %vm410 = vmand %vm377, %vm394
        %vm411 = vmand %vm378, %vm395
        %vm412 = vmand %vm379, %vm396
        %vm413 = vmand %vm380, %vm397
        %vm414 = vmand %vm381, %vm398
        %vm415 = vmand %vm382, %vm399
        %vm416 = vmand %vm383, %vm400
        %vm417 = vmand %vm384, %vm401
        %vm418 = vmand %vm385, %vm402
        %vm419 = vmand %vm386, %vm403
        %vm420 = vmand %vm387, %vm404
        %vm421 = vmand %vm388, %vm405
        %vm422 = vmand %vm389, %vm406
        %vm423 = vmand %vm390, %vm407
        %v424 = vsel %vm408, 1, 0
        %v425 = vsel %vm409, 1, 0
        %v426 = vsel %vm410, 1, 0
        %v427 = vsel %vm411, 1, 0
        %v428 = vsel %vm412, 1, 0
        %v429 = vsel %vm413, 1, 0
        %v430 = vsel %vm414, 1, 0
        %v431 = vsel %vm415, 1, 0
        %v432 = vsel %vm416, 1, 0
        %v433 = vsel %vm417, 1, 0
        %v434 = vsel %vm418, 1, 0
        %v435 = vsel %vm419, 1, 0
        %v436 = vsel %vm420, 1, 0
        %v437 = vsel %vm421, 1, 0
        %v438 = vsel %vm422, 1, 0
        %v439 = vsel %vm423, 1, 0
        %v440 = vcvt.s32.f32 %v424
        %v441 = vcvt.s32.f32 %v425
        %v442 = vcvt.s32.f32 %v426
        %v443 = vcvt.s32.f32 %v427
        %v444 = vcvt.s32.f32 %v428
        %v445 = vcvt.s32.f32 %v429
        %v446 = vcvt.s32.f32 %v430
        %v447 = vcvt.s32.f32 %v431
        %v448 = vcvt.s32.f32 %v432
        %v449 = vcvt.s32.f32 %v433
        %v450 = vcvt.s32.f32 %v434
        %v451 = vcvt.s32.f32 %v435
        %v452 = vcvt.s32.f32 %v436
        %v453 = vcvt.s32.f32 %v437
        %v454 = vcvt.s32.f32 %v438
        %v455 = vcvt.s32.f32 %v439
        %v456 = vand.u32 %v351, 4294901760
        %457 = vmatpush.msra.mxu0 %v456
        %v458 = vand.u32 %v350, 4294901760
        %459 = vmatpush.msra.mxu0 %v458
        %v460 = vand.u32 %v349, 4294901760
        %461 = vmatpush.msra.mxu0 %v460
        %v462 = vand.u32 %v348, 4294901760
        %463 = vmatpush.msra.mxu0 %v462
        %v464 = vand.u32 %v347, 4294901760
        %465 = vmatpush.msra.mxu0 %v464
        %v466 = vand.u32 %v346, 4294901760
        %467 = vmatpush.msra.mxu0 %v466
        %v468 = vand.u32 %v345, 4294901760
        %469 = vmatpush.msra.mxu0 %v468
        %v470 = vand.u32 %v344, 4294901760
        %471 = vmatpush.msra.mxu0 %v470
        %v472 = vand.u32 %v343, 4294901760
        %473 = vmatpush.msra.mxu0 %v472
        %v474 = vand.u32 %v342, 4294901760
        %475 = vmatpush.msra.mxu0 %v474
        %v476 = vand.u32 %v341, 4294901760
        %477 = vmatpush.msra.mxu0 %v476
        %v478 = vand.u32 %v340, 4294901760
        %479 = vmatpush.msra.mxu0 %v478
        %v480 = vand.u32 %v339, 4294901760
        %481 = vmatpush.msra.mxu0 %v480
        %v482 = vand.u32 %v338, 4294901760
        %483 = vmatpush.msra.mxu0 %v482
        %v484 = vand.u32 %v337, 4294901760
        %485 = vmatpush.msra.mxu0 %v484
        %v486 = vand.u32 %v336, 4294901760
        %487 = vmatpush.msra.mxu0 %v486
        %v488 = vand.u32 %v440, 4294901760
        %v489 = vsub.f32 %v440, %v488
        %v490 = vand.u32 %v489, 4294901760
        %v491 = vsub.f32 %v489, %v490
        %v492 = vand.u32 %v491, 4294901760
        %493 = vmatmul.f32.gmra.mxu0 %v492
        %v494 = vpop.f32.mrf.mxu0
        %v495 = vadd.f32 0.0, %v494
        %v496 = vand.u32 %v441, 4294901760
        %v497 = vsub.f32 %v441, %v496
        %v498 = vand.u32 %v497, 4294901760
        %v499 = vsub.f32 %v497, %v498
        %v500 = vand.u32 %v499, 4294901760
        %501 = vmatmul.f32.gmra.mxu0 %v500
        %v502 = vpop.f32.mrf.mxu0
        %v503 = vadd.f32 0.0, %v502
        %v504 = vand.u32 %v442, 4294901760
        %v505 = vsub.f32 %v442, %v504
        %v506 = vand.u32 %v505, 4294901760
        %v507 = vsub.f32 %v505, %v506
        %v508 = vand.u32 %v507, 4294901760
        %509 = vmatmul.f32.gmra.mxu0 %v508
        %v510 = vpop.f32.mrf.mxu0
        %v511 = vadd.f32 0.0, %v510
        %v512 = vand.u32 %v443, 4294901760
        %v513 = vsub.f32 %v443, %v512
        %v514 = vand.u32 %v513, 4294901760
        %v515 = vsub.f32 %v513, %v514
        %v516 = vand.u32 %v515, 4294901760
        %517 = vmatmul.f32.gmra.mxu0 %v516
        %v518 = vpop.f32.mrf.mxu0
        %v519 = vadd.f32 0.0, %v518
        %v520 = vand.u32 %v444, 4294901760
        %v521 = vsub.f32 %v444, %v520
        %v522 = vand.u32 %v521, 4294901760
        %v523 = vsub.f32 %v521, %v522
        %v524 = vand.u32 %v523, 4294901760
        %525 = vmatmul.f32.gmra.mxu0 %v524
        %v526 = vpop.f32.mrf.mxu0
        %v527 = vadd.f32 0.0, %v526
        %v528 = vand.u32 %v445, 4294901760
        %v529 = vsub.f32 %v445, %v528
        %v530 = vand.u32 %v529, 4294901760
        %v531 = vsub.f32 %v529, %v530
        %v532 = vand.u32 %v531, 4294901760
        %533 = vmatmul.f32.gmra.mxu0 %v532
        %v534 = vpop.f32.mrf.mxu0
        %v535 = vadd.f32 0.0, %v534
        %v536 = vand.u32 %v446, 4294901760
        %v537 = vsub.f32 %v446, %v536
        %v538 = vand.u32 %v537, 4294901760
        %v539 = vsub.f32 %v537, %v538
        %v540 = vand.u32 %v539, 4294901760
        %541 = vmatmul.f32.gmra.mxu0 %v540
        %v542 = vpop.f32.mrf.mxu0
        %v543 = vadd.f32 0.0, %v542
        %v544 = vand.u32 %v447, 4294901760
        %v545 = vsub.f32 %v447, %v544
        %v546 = vand.u32 %v545, 4294901760
        %v547 = vsub.f32 %v545, %v546
        %v548 = vand.u32 %v547, 4294901760
        %549 = vmatmul.f32.gmra.mxu0 %v548
        %v550 = vpop.f32.mrf.mxu0
        %v551 = vadd.f32 0.0, %v550
        %v552 = vand.u32 %v448, 4294901760
        %v553 = vsub.f32 %v448, %v552
        %v554 = vand.u32 %v553, 4294901760
        %v555 = vsub.f32 %v553, %v554
        %v556 = vand.u32 %v555, 4294901760
        %557 = vmatmul.f32.gmra.mxu0 %v556
        %v558 = vpop.f32.mrf.mxu0
        %v559 = vadd.f32 0.0, %v558
        %v560 = vand.u32 %v449, 4294901760
        %v561 = vsub.f32 %v449, %v560
        %v562 = vand.u32 %v561, 4294901760
        %v563 = vsub.f32 %v561, %v562
        %v564 = vand.u32 %v563, 4294901760
        %565 = vmatmul.f32.gmra.mxu0 %v564
        %v566 = vpop.f32.mrf.mxu0
        %v567 = vadd.f32 0.0, %v566
        %v568 = vand.u32 %v450, 4294901760
        %v569 = vsub.f32 %v450, %v568
        %v570 = vand.u32 %v569, 4294901760
        %v571 = vsub.f32 %v569, %v570
        %v572 = vand.u32 %v571, 4294901760
        %573 = vmatmul.f32.gmra.mxu0 %v572
        %v574 = vpop.f32.mrf.mxu0
        %v575 = vadd.f32 0.0, %v574
        %v576 = vand.u32 %v451, 4294901760
        %v577 = vsub.f32 %v451, %v576
        %v578 = vand.u32 %v577, 4294901760
        %v579 = vsub.f32 %v577, %v578
        %v580 = vand.u32 %v579, 4294901760
        %581 = vmatmul.f32.gmra.mxu0 %v580
        %v582 = vpop.f32.mrf.mxu0
        %v583 = vadd.f32 0.0, %v582
        %v584 = vand.u32 %v452, 4294901760
        %v585 = vsub.f32 %v452, %v584
        %v586 = vand.u32 %v585, 4294901760
        %v587 = vsub.f32 %v585, %v586
        %v588 = vand.u32 %v587, 4294901760
        %589 = vmatmul.f32.gmra.mxu0 %v588
        %v590 = vpop.f32.mrf.mxu0
        %v591 = vadd.f32 0.0, %v590
        %v592 = vand.u32 %v453, 4294901760
        %v593 = vsub.f32 %v453, %v592
        %v594 = vand.u32 %v593, 4294901760
        %v595 = vsub.f32 %v593, %v594
        %v596 = vand.u32 %v595, 4294901760
        %597 = vmatmul.f32.gmra.mxu0 %v596
        %v598 = vpop.f32.mrf.mxu0
        %v599 = vadd.f32 0.0, %v598
        %v600 = vand.u32 %v454, 4294901760
        %v601 = vsub.f32 %v454, %v600
        %v602 = vand.u32 %v601, 4294901760
        %v603 = vsub.f32 %v601, %v602
        %v604 = vand.u32 %v603, 4294901760
        %605 = vmatmul.f32.gmra.mxu0 %v604
        %v606 = vpop.f32.mrf.mxu0
        %v607 = vadd.f32 0.0, %v606
        %v608 = vand.u32 %v455, 4294901760
        %v609 = vsub.f32 %v455, %v608
        %v610 = vand.u32 %v609, 4294901760
        %v611 = vsub.f32 %v609, %v610
        %v612 = vand.u32 %v611, 4294901760
        %613 = vmatmul.f32.gmra.mxu0 %v612
        %v614 = vpop.f32.mrf.mxu0
        %v615 = vadd.f32 0.0, %v614
        %616 = vdwg.mxu0
        %v617 = vand.u32 %v351, 4294901760
        %v618 = vsub.f32 %v351, %v617
        %v619 = vand.u32 %v618, 4294901760
        %v620 = vsub.f32 %v618, %v619
        %v621 = vand.u32 %v620, 4294901760
        %622 = vmatpush.msra.mxu0 %v621
        %v623 = vand.u32 %v350, 4294901760
        %v624 = vsub.f32 %v350, %v623
        %v625 = vand.u32 %v624, 4294901760
        %v626 = vsub.f32 %v624, %v625
        %v627 = vand.u32 %v626, 4294901760
        %628 = vmatpush.msra.mxu0 %v627
        %v629 = vand.u32 %v349, 4294901760
        %v630 = vsub.f32 %v349, %v629
        %v631 = vand.u32 %v630, 4294901760
        %v632 = vsub.f32 %v630, %v631
        %v633 = vand.u32 %v632, 4294901760
        %634 = vmatpush.msra.mxu0 %v633
        %v635 = vand.u32 %v348, 4294901760
        %v636 = vsub.f32 %v348, %v635
        %v637 = vand.u32 %v636, 4294901760
        %v638 = vsub.f32 %v636, %v637
        %v639 = vand.u32 %v638, 4294901760
        %640 = vmatpush.msra.mxu0 %v639
        %v641 = vand.u32 %v347, 4294901760
        %v642 = vsub.f32 %v347, %v641
        %v643 = vand.u32 %v642, 4294901760
        %v644 = vsub.f32 %v642, %v643
        %v645 = vand.u32 %v644, 4294901760
        %646 = vmatpush.msra.mxu0 %v645
        %v647 = vand.u32 %v346, 4294901760
        %v648 = vsub.f32 %v346, %v647
        %v649 = vand.u32 %v648, 4294901760
        %v650 = vsub.f32 %v648, %v649
        %v651 = vand.u32 %v650, 4294901760
        %652 = vmatpush.msra.mxu0 %v651
        %v653 = vand.u32 %v345, 4294901760
        %v654 = vsub.f32 %v345, %v653
        %v655 = vand.u32 %v654, 4294901760
        %v656 = vsub.f32 %v654, %v655
        %v657 = vand.u32 %v656, 4294901760
        %658 = vmatpush.msra.mxu0 %v657
        %v659 = vand.u32 %v344, 4294901760
        %v660 = vsub.f32 %v344, %v659
        %v661 = vand.u32 %v660, 4294901760
        %v662 = vsub.f32 %v660, %v661
        %v663 = vand.u32 %v662, 4294901760
        %664 = vmatpush.msra.mxu0 %v663
        %v665 = vand.u32 %v343, 4294901760
        %v666 = vsub.f32 %v343, %v665
        %v667 = vand.u32 %v666, 4294901760
        %v668 = vsub.f32 %v666, %v667
        %v669 = vand.u32 %v668, 4294901760
        %670 = vmatpush.msra.mxu0 %v669
        %v671 = vand.u32 %v342, 4294901760
        %v672 = vsub.f32 %v342, %v671
        %v673 = vand.u32 %v672, 4294901760
        %v674 = vsub.f32 %v672, %v673
        %v675 = vand.u32 %v674, 4294901760
        %676 = vmatpush.msra.mxu0 %v675
        %v677 = vand.u32 %v341, 4294901760
        %v678 = vsub.f32 %v341, %v677
        %v679 = vand.u32 %v678, 4294901760
        %v680 = vsub.f32 %v678, %v679
        %v681 = vand.u32 %v680, 4294901760
        %682 = vmatpush.msra.mxu0 %v681
        %v683 = vand.u32 %v340, 4294901760
        %v684 = vsub.f32 %v340, %v683
        %v685 = vand.u32 %v684, 4294901760
        %v686 = vsub.f32 %v684, %v685
        %v687 = vand.u32 %v686, 4294901760
        %688 = vmatpush.msra.mxu0 %v687
        %v689 = vand.u32 %v339, 4294901760
        %v690 = vsub.f32 %v339, %v689
        %v691 = vand.u32 %v690, 4294901760
        %v692 = vsub.f32 %v690, %v691
        %v693 = vand.u32 %v692, 4294901760
        %694 = vmatpush.msra.mxu0 %v693
        %v695 = vand.u32 %v338, 4294901760
        %v696 = vsub.f32 %v338, %v695
        %v697 = vand.u32 %v696, 4294901760
        %v698 = vsub.f32 %v696, %v697
        %v699 = vand.u32 %v698, 4294901760
        %700 = vmatpush.msra.mxu0 %v699
        %v701 = vand.u32 %v337, 4294901760
        %v702 = vsub.f32 %v337, %v701
        %v703 = vand.u32 %v702, 4294901760
        %v704 = vsub.f32 %v702, %v703
        %v705 = vand.u32 %v704, 4294901760
        %706 = vmatpush.msra.mxu0 %v705
        %v707 = vand.u32 %v336, 4294901760
        %v708 = vsub.f32 %v336, %v707
        %v709 = vand.u32 %v708, 4294901760
        %v710 = vsub.f32 %v708, %v709
        %v711 = vand.u32 %v710, 4294901760
        %712 = vmatpush.msra.mxu0 %v711
        %v713 = vand.u32 %v440, 4294901760
        %714 = vmatmul.f32.gmra.mxu0 %v713
        %v715 = vpop.f32.mrf.mxu0
        %v716 = vadd.f32 %v495, %v715
        %v717 = vand.u32 %v441, 4294901760
        %718 = vmatmul.f32.gmra.mxu0 %v717
        %v719 = vpop.f32.mrf.mxu0
        %v720 = vadd.f32 %v503, %v719
        %v721 = vand.u32 %v442, 4294901760
        %722 = vmatmul.f32.gmra.mxu0 %v721
        %v723 = vpop.f32.mrf.mxu0
        %v724 = vadd.f32 %v511, %v723
        %v725 = vand.u32 %v443, 4294901760
        %726 = vmatmul.f32.gmra.mxu0 %v725
        %v727 = vpop.f32.mrf.mxu0
        %v728 = vadd.f32 %v519, %v727
        %v729 = vand.u32 %v444, 4294901760
        %730 = vmatmul.f32.gmra.mxu0 %v729
        %v731 = vpop.f32.mrf.mxu0
        %v732 = vadd.f32 %v527, %v731
        %v733 = vand.u32 %v445, 4294901760
        %734 = vmatmul.f32.gmra.mxu0 %v733
        %v735 = vpop.f32.mrf.mxu0
        %v736 = vadd.f32 %v535, %v735
        %v737 = vand.u32 %v446, 4294901760
        %738 = vmatmul.f32.gmra.mxu0 %v737
        %v739 = vpop.f32.mrf.mxu0
        %v740 = vadd.f32 %v543, %v739
        %v741 = vand.u32 %v447, 4294901760
        %742 = vmatmul.f32.gmra.mxu0 %v741
        %v743 = vpop.f32.mrf.mxu0
        %v744 = vadd.f32 %v551, %v743
        %v745 = vand.u32 %v448, 4294901760
        %746 = vmatmul.f32.gmra.mxu0 %v745
        %v747 = vpop.f32.mrf.mxu0
        %v748 = vadd.f32 %v559, %v747
        %v749 = vand.u32 %v449, 4294901760
        %750 = vmatmul.f32.gmra.mxu0 %v749
        %v751 = vpop.f32.mrf.mxu0
        %v752 = vadd.f32 %v567, %v751
        %v753 = vand.u32 %v450, 4294901760
        %754 = vmatmul.f32.gmra.mxu0 %v753
        %v755 = vpop.f32.mrf.mxu0
        %v756 = vadd.f32 %v575, %v755
        %v757 = vand.u32 %v451, 4294901760
        %758 = vmatmul.f32.gmra.mxu0 %v757
        %v759 = vpop.f32.mrf.mxu0
        %v760 = vadd.f32 %v583, %v759
        %v761 = vand.u32 %v452, 4294901760
        %762 = vmatmul.f32.gmra.mxu0 %v761
        %v763 = vpop.f32.mrf.mxu0
        %v764 = vadd.f32 %v591, %v763
        %v765 = vand.u32 %v453, 4294901760
        %766 = vmatmul.f32.gmra.mxu0 %v765
        %v767 = vpop.f32.mrf.mxu0
        %v768 = vadd.f32 %v599, %v767
        %v769 = vand.u32 %v454, 4294901760
        %770 = vmatmul.f32.gmra.mxu0 %v769
        %v771 = vpop.f32.mrf.mxu0
        %v772 = vadd.f32 %v607, %v771
        %v773 = vand.u32 %v455, 4294901760
        %774 = vmatmul.f32.gmra.mxu0 %v773
        %v775 = vpop.f32.mrf.mxu0
        %v776 = vadd.f32 %v615, %v775
        %777 = vdwg.mxu0
        %v778 = vand.u32 %v351, 4294901760
        %v779 = vsub.f32 %v351, %v778
        %780 = vmatpush.msra.mxu0 %v779
        %v781 = vand.u32 %v350, 4294901760
        %v782 = vsub.f32 %v350, %v781
        %783 = vmatpush.msra.mxu0 %v782
        %v784 = vand.u32 %v349, 4294901760
        %v785 = vsub.f32 %v349, %v784
        %786 = vmatpush.msra.mxu0 %v785
        %v787 = vand.u32 %v348, 4294901760
        %v788 = vsub.f32 %v348, %v787
        %789 = vmatpush.msra.mxu0 %v788
        %v790 = vand.u32 %v347, 4294901760
        %v791 = vsub.f32 %v347, %v790
        %792 = vmatpush.msra.mxu0 %v791
        %v793 = vand.u32 %v346, 4294901760
        %v794 = vsub.f32 %v346, %v793
        %795 = vmatpush.msra.mxu0 %v794
        %v796 = vand.u32 %v345, 4294901760
        %v797 = vsub.f32 %v345, %v796
        %798 = vmatpush.msra.mxu0 %v797
        %v799 = vand.u32 %v344, 4294901760
        %v800 = vsub.f32 %v344, %v799
        %801 = vmatpush.msra.mxu0 %v800
        %v802 = vand.u32 %v343, 4294901760
        %v803 = vsub.f32 %v343, %v802
        %804 = vmatpush.msra.mxu0 %v803
        %v805 = vand.u32 %v342, 4294901760
        %v806 = vsub.f32 %v342, %v805
        %807 = vmatpush.msra.mxu0 %v806
        %v808 = vand.u32 %v341, 4294901760
        %v809 = vsub.f32 %v341, %v808
        %810 = vmatpush.msra.mxu0 %v809
        %v811 = vand.u32 %v340, 4294901760
        %v812 = vsub.f32 %v340, %v811
        %813 = vmatpush.msra.mxu0 %v812
        %v814 = vand.u32 %v339, 4294901760
        %v815 = vsub.f32 %v339, %v814
        %816 = vmatpush.msra.mxu0 %v815
        %v817 = vand.u32 %v338, 4294901760
        %v818 = vsub.f32 %v338, %v817
        %819 = vmatpush.msra.mxu0 %v818
        %v820 = vand.u32 %v337, 4294901760
        %v821 = vsub.f32 %v337, %v820
        %822 = vmatpush.msra.mxu0 %v821
        %v823 = vand.u32 %v336, 4294901760
        %v824 = vsub.f32 %v336, %v823
        %825 = vmatpush.msra.mxu0 %v824
        %v826 = vand.u32 %v440, 4294901760
        %v827 = vsub.f32 %v440, %v826
        %828 = vmatmul.f32.gmra.mxu0 %v827
        %v829 = vpop.f32.mrf.mxu0
        %v830 = vadd.f32 %v716, %v829
        %v831 = vand.u32 %v441, 4294901760
        %v832 = vsub.f32 %v441, %v831
        %833 = vmatmul.f32.gmra.mxu0 %v832
        %v834 = vpop.f32.mrf.mxu0
        %v835 = vadd.f32 %v720, %v834
        %v836 = vand.u32 %v442, 4294901760
        %v837 = vsub.f32 %v442, %v836
        %838 = vmatmul.f32.gmra.mxu0 %v837
        %v839 = vpop.f32.mrf.mxu0
        %v840 = vadd.f32 %v724, %v839
        %v841 = vand.u32 %v443, 4294901760
        %v842 = vsub.f32 %v443, %v841
        %843 = vmatmul.f32.gmra.mxu0 %v842
        %v844 = vpop.f32.mrf.mxu0
        %v845 = vadd.f32 %v728, %v844
        %v846 = vand.u32 %v444, 4294901760
        %v847 = vsub.f32 %v444, %v846
        %848 = vmatmul.f32.gmra.mxu0 %v847
        %v849 = vpop.f32.mrf.mxu0
        %v850 = vadd.f32 %v732, %v849
        %v851 = vand.u32 %v445, 4294901760
        %v852 = vsub.f32 %v445, %v851
        %853 = vmatmul.f32.gmra.mxu0 %v852
        %v854 = vpop.f32.mrf.mxu0
        %v855 = vadd.f32 %v736, %v854
        %v856 = vand.u32 %v446, 4294901760
        %v857 = vsub.f32 %v446, %v856
        %858 = vmatmul.f32.gmra.mxu0 %v857
        %v859 = vpop.f32.mrf.mxu0
        %v860 = vadd.f32 %v740, %v859
        %v861 = vand.u32 %v447, 4294901760
        %v862 = vsub.f32 %v447, %v861
        %863 = vmatmul.f32.gmra.mxu0 %v862
        %v864 = vpop.f32.mrf.mxu0
        %v865 = vadd.f32 %v744, %v864
        %v866 = vand.u32 %v448, 4294901760
        %v867 = vsub.f32 %v448, %v866
        %868 = vmatmul.f32.gmra.mxu0 %v867
        %v869 = vpop.f32.mrf.mxu0
        %v870 = vadd.f32 %v748, %v869
        %v871 = vand.u32 %v449, 4294901760
        %v872 = vsub.f32 %v449, %v871
        %873 = vmatmul.f32.gmra.mxu0 %v872
        %v874 = vpop.f32.mrf.mxu0
        %v875 = vadd.f32 %v752, %v874
        %v876 = vand.u32 %v450, 4294901760
        %v877 = vsub.f32 %v450, %v876
        %878 = vmatmul.f32.gmra.mxu0 %v877
        %v879 = vpop.f32.mrf.mxu0
        %v880 = vadd.f32 %v756, %v879
        %v881 = vand.u32 %v451, 4294901760
        %v882 = vsub.f32 %v451, %v881
        %883 = vmatmul.f32.gmra.mxu0 %v882
        %v884 = vpop.f32.mrf.mxu0
        %v885 = vadd.f32 %v760, %v884
        %v886 = vand.u32 %v452, 4294901760
        %v887 = vsub.f32 %v452, %v886
        %888 = vmatmul.f32.gmra.mxu0 %v887
        %v889 = vpop.f32.mrf.mxu0
        %v890 = vadd.f32 %v764, %v889
        %v891 = vand.u32 %v453, 4294901760
        %v892 = vsub.f32 %v453, %v891
        %893 = vmatmul.f32.gmra.mxu0 %v892
        %v894 = vpop.f32.mrf.mxu0
        %v895 = vadd.f32 %v768, %v894
        %v896 = vand.u32 %v454, 4294901760
        %v897 = vsub.f32 %v454, %v896
        %898 = vmatmul.f32.gmra.mxu0 %v897
        %v899 = vpop.f32.mrf.mxu0
        %v900 = vadd.f32 %v772, %v899
        %v901 = vand.u32 %v455, 4294901760
        %v902 = vsub.f32 %v455, %v901
        %903 = vmatmul.f32.gmra.mxu0 %v902
        %v904 = vpop.f32.mrf.mxu0
        %v905 = vadd.f32 %v776, %v904
        %906 = vdwg.mxu0
        %v907 = vand.u32 %v351, 4294901760
        %908 = vmatpush.msra.mxu0 %v907
        %v909 = vand.u32 %v350, 4294901760
        %910 = vmatpush.msra.mxu0 %v909
        %v911 = vand.u32 %v349, 4294901760
        %912 = vmatpush.msra.mxu0 %v911
        %v913 = vand.u32 %v348, 4294901760
        %914 = vmatpush.msra.mxu0 %v913
        %v915 = vand.u32 %v347, 4294901760
        %916 = vmatpush.msra.mxu0 %v915
        %v917 = vand.u32 %v346, 4294901760
        %918 = vmatpush.msra.mxu0 %v917
        %v919 = vand.u32 %v345, 4294901760
        %920 = vmatpush.msra.mxu0 %v919
        %v921 = vand.u32 %v344, 4294901760
        %922 = vmatpush.msra.mxu0 %v921
        %v923 = vand.u32 %v343, 4294901760
        %924 = vmatpush.msra.mxu0 %v923
        %v925 = vand.u32 %v342, 4294901760
        %926 = vmatpush.msra.mxu0 %v925
        %v927 = vand.u32 %v341, 4294901760
        %928 = vmatpush.msra.mxu0 %v927
        %v929 = vand.u32 %v340, 4294901760
        %930 = vmatpush.msra.mxu0 %v929
        %v931 = vand.u32 %v339, 4294901760
        %932 = vmatpush.msra.mxu0 %v931
        %v933 = vand.u32 %v338, 4294901760
        %934 = vmatpush.msra.mxu0 %v933
        %v935 = vand.u32 %v337, 4294901760
        %936 = vmatpush.msra.mxu0 %v935
        %v937 = vand.u32 %v336, 4294901760
        %938 = vmatpush.msra.mxu0 %v937
        %v939 = vand.u32 %v440, 4294901760
        %v940 = vsub.f32 %v440, %v939
        %v941 = vand.u32 %v940, 4294901760
        %942 = vmatmul.f32.gmra.mxu0 %v941
        %v943 = vpop.f32.mrf.mxu0
        %v944 = vadd.f32 %v830, %v943
        %v945 = vand.u32 %v441, 4294901760
        %v946 = vsub.f32 %v441, %v945
        %v947 = vand.u32 %v946, 4294901760
        %948 = vmatmul.f32.gmra.mxu0 %v947
        %v949 = vpop.f32.mrf.mxu0
        %v950 = vadd.f32 %v835, %v949
        %v951 = vand.u32 %v442, 4294901760
        %v952 = vsub.f32 %v442, %v951
        %v953 = vand.u32 %v952, 4294901760
        %954 = vmatmul.f32.gmra.mxu0 %v953
        %v955 = vpop.f32.mrf.mxu0
        %v956 = vadd.f32 %v840, %v955
        %v957 = vand.u32 %v443, 4294901760
        %v958 = vsub.f32 %v443, %v957
        %v959 = vand.u32 %v958, 4294901760
        %960 = vmatmul.f32.gmra.mxu0 %v959
        %v961 = vpop.f32.mrf.mxu0
        %v962 = vadd.f32 %v845, %v961
        %v963 = vand.u32 %v444, 4294901760
        %v964 = vsub.f32 %v444, %v963
        %v965 = vand.u32 %v964, 4294901760
        %966 = vmatmul.f32.gmra.mxu0 %v965
        %v967 = vpop.f32.mrf.mxu0
        %v968 = vadd.f32 %v850, %v967
        %v969 = vand.u32 %v445, 4294901760
        %v970 = vsub.f32 %v445, %v969
        %v971 = vand.u32 %v970, 4294901760
        %972 = vmatmul.f32.gmra.mxu0 %v971
        %v973 = vpop.f32.mrf.mxu0
        %v974 = vadd.f32 %v855, %v973
        %v975 = vand.u32 %v446, 4294901760
        %v976 = vsub.f32 %v446, %v975
        %v977 = vand.u32 %v976, 4294901760
        %978 = vmatmul.f32.gmra.mxu0 %v977
        %v979 = vpop.f32.mrf.mxu0
        %v980 = vadd.f32 %v860, %v979
        %v981 = vand.u32 %v447, 4294901760
        %v982 = vsub.f32 %v447, %v981
        %v983 = vand.u32 %v982, 4294901760
        %984 = vmatmul.f32.gmra.mxu0 %v983
        %v985 = vpop.f32.mrf.mxu0
        %v986 = vadd.f32 %v865, %v985
        %v987 = vand.u32 %v448, 4294901760
        %v988 = vsub.f32 %v448, %v987
        %v989 = vand.u32 %v988, 4294901760
        %990 = vmatmul.f32.gmra.mxu0 %v989
        %v991 = vpop.f32.mrf.mxu0
        %v992 = vadd.f32 %v870, %v991
        %v993 = vand.u32 %v449, 4294901760
        %v994 = vsub.f32 %v449, %v993
        %v995 = vand.u32 %v994, 4294901760
        %996 = vmatmul.f32.gmra.mxu0 %v995
        %v997 = vpop.f32.mrf.mxu0
        %v998 = vadd.f32 %v875, %v997
        %v999 = vand.u32 %v450, 4294901760
        %v1000 = vsub.f32 %v450, %v999
        %v1001 = vand.u32 %v1000, 4294901760
        %1002 = vmatmul.f32.gmra.mxu0 %v1001
        %v1003 = vpop.f32.mrf.mxu0
        %v1004 = vadd.f32 %v880, %v1003
        %v1005 = vand.u32 %v451, 4294901760
        %v1006 = vsub.f32 %v451, %v1005
        %v1007 = vand.u32 %v1006, 4294901760
        %1008 = vmatmul.f32.gmra.mxu0 %v1007
        %v1009 = vpop.f32.mrf.mxu0
        %v1010 = vadd.f32 %v885, %v1009
        %v1011 = vand.u32 %v452, 4294901760
        %v1012 = vsub.f32 %v452, %v1011
        %v1013 = vand.u32 %v1012, 4294901760
        %1014 = vmatmul.f32.gmra.mxu0 %v1013
        %v1015 = vpop.f32.mrf.mxu0
        %v1016 = vadd.f32 %v890, %v1015
        %v1017 = vand.u32 %v453, 4294901760
        %v1018 = vsub.f32 %v453, %v1017
        %v1019 = vand.u32 %v1018, 4294901760
        %1020 = vmatmul.f32.gmra.mxu0 %v1019
        %v1021 = vpop.f32.mrf.mxu0
        %v1022 = vadd.f32 %v895, %v1021
        %v1023 = vand.u32 %v454, 4294901760
        %v1024 = vsub.f32 %v454, %v1023
        %v1025 = vand.u32 %v1024, 4294901760
        %1026 = vmatmul.f32.gmra.mxu0 %v1025
        %v1027 = vpop.f32.mrf.mxu0
        %v1028 = vadd.f32 %v900, %v1027
        %v1029 = vand.u32 %v455, 4294901760
        %v1030 = vsub.f32 %v455, %v1029
        %v1031 = vand.u32 %v1030, 4294901760
        %1032 = vmatmul.f32.gmra.mxu0 %v1031
        %v1033 = vpop.f32.mrf.mxu0
        %v1034 = vadd.f32 %v905, %v1033
        %1035 = vdwg.mxu0
        %v1036 = vand.u32 %v351, 4294901760
        %v1037 = vsub.f32 %v351, %v1036
        %v1038 = vand.u32 %v1037, 4294901760
        %1039 = vmatpush.msra.mxu0 %v1038
        %v1040 = vand.u32 %v350, 4294901760
        %v1041 = vsub.f32 %v350, %v1040
        %v1042 = vand.u32 %v1041, 4294901760
        %1043 = vmatpush.msra.mxu0 %v1042
        %v1044 = vand.u32 %v349, 4294901760
        %v1045 = vsub.f32 %v349, %v1044
        %v1046 = vand.u32 %v1045, 4294901760
        %1047 = vmatpush.msra.mxu0 %v1046
        %v1048 = vand.u32 %v348, 4294901760
        %v1049 = vsub.f32 %v348, %v1048
        %v1050 = vand.u32 %v1049, 4294901760
        %1051 = vmatpush.msra.mxu0 %v1050
        %v1052 = vand.u32 %v347, 4294901760
        %v1053 = vsub.f32 %v347, %v1052
        %v1054 = vand.u32 %v1053, 4294901760
        %1055 = vmatpush.msra.mxu0 %v1054
        %v1056 = vand.u32 %v346, 4294901760
        %v1057 = vsub.f32 %v346, %v1056
        %v1058 = vand.u32 %v1057, 4294901760
        %1059 = vmatpush.msra.mxu0 %v1058
        %v1060 = vand.u32 %v345, 4294901760
        %v1061 = vsub.f32 %v345, %v1060
        %v1062 = vand.u32 %v1061, 4294901760
        %1063 = vmatpush.msra.mxu0 %v1062
        %v1064 = vand.u32 %v344, 4294901760
        %v1065 = vsub.f32 %v344, %v1064
        %v1066 = vand.u32 %v1065, 4294901760
        %1067 = vmatpush.msra.mxu0 %v1066
        %v1068 = vand.u32 %v343, 4294901760
        %v1069 = vsub.f32 %v343, %v1068
        %v1070 = vand.u32 %v1069, 4294901760
        %1071 = vmatpush.msra.mxu0 %v1070
        %v1072 = vand.u32 %v342, 4294901760
        %v1073 = vsub.f32 %v342, %v1072
        %v1074 = vand.u32 %v1073, 4294901760
        %1075 = vmatpush.msra.mxu0 %v1074
        %v1076 = vand.u32 %v341, 4294901760
        %v1077 = vsub.f32 %v341, %v1076
        %v1078 = vand.u32 %v1077, 4294901760
        %1079 = vmatpush.msra.mxu0 %v1078
        %v1080 = vand.u32 %v340, 4294901760
        %v1081 = vsub.f32 %v340, %v1080
        %v1082 = vand.u32 %v1081, 4294901760
        %1083 = vmatpush.msra.mxu0 %v1082
        %v1084 = vand.u32 %v339, 4294901760
        %v1085 = vsub.f32 %v339, %v1084
        %v1086 = vand.u32 %v1085, 4294901760
        %1087 = vmatpush.msra.mxu0 %v1086
        %v1088 = vand.u32 %v338, 4294901760
        %v1089 = vsub.f32 %v338, %v1088
        %v1090 = vand.u32 %v1089, 4294901760
        %1091 = vmatpush.msra.mxu0 %v1090
        %v1092 = vand.u32 %v337, 4294901760
        %v1093 = vsub.f32 %v337, %v1092
        %v1094 = vand.u32 %v1093, 4294901760
        %1095 = vmatpush.msra.mxu0 %v1094
        %v1096 = vand.u32 %v336, 4294901760
        %v1097 = vsub.f32 %v336, %v1096
        %v1098 = vand.u32 %v1097, 4294901760
        %1099 = vmatpush.msra.mxu0 %v1098
        %v1100 = vand.u32 %v440, 4294901760
        %1101 = vmatmul.f32.gmra.mxu0 %v1100
        %v1102 = vpop.f32.mrf.mxu0
        %v1103 = vadd.f32 %v944, %v1102
        %v1104 = vand.u32 %v441, 4294901760
        %1105 = vmatmul.f32.gmra.mxu0 %v1104
        %v1106 = vpop.f32.mrf.mxu0
        %v1107 = vadd.f32 %v950, %v1106
        %v1108 = vand.u32 %v442, 4294901760
        %1109 = vmatmul.f32.gmra.mxu0 %v1108
        %v1110 = vpop.f32.mrf.mxu0
        %v1111 = vadd.f32 %v956, %v1110
        %v1112 = vand.u32 %v443, 4294901760
        %1113 = vmatmul.f32.gmra.mxu0 %v1112
        %v1114 = vpop.f32.mrf.mxu0
        %v1115 = vadd.f32 %v962, %v1114
        %v1116 = vand.u32 %v444, 4294901760
        %1117 = vmatmul.f32.gmra.mxu0 %v1116
        %v1118 = vpop.f32.mrf.mxu0
        %v1119 = vadd.f32 %v968, %v1118
        %v1120 = vand.u32 %v445, 4294901760
        %1121 = vmatmul.f32.gmra.mxu0 %v1120
        %v1122 = vpop.f32.mrf.mxu0
        %v1123 = vadd.f32 %v974, %v1122
        %v1124 = vand.u32 %v446, 4294901760
        %1125 = vmatmul.f32.gmra.mxu0 %v1124
        %v1126 = vpop.f32.mrf.mxu0
        %v1127 = vadd.f32 %v980, %v1126
        %v1128 = vand.u32 %v447, 4294901760
        %1129 = vmatmul.f32.gmra.mxu0 %v1128
        %v1130 = vpop.f32.mrf.mxu0
        %v1131 = vadd.f32 %v986, %v1130
        %v1132 = vand.u32 %v448, 4294901760
        %1133 = vmatmul.f32.gmra.mxu0 %v1132
        %v1134 = vpop.f32.mrf.mxu0
        %v1135 = vadd.f32 %v992, %v1134
        %v1136 = vand.u32 %v449, 4294901760
        %1137 = vmatmul.f32.gmra.mxu0 %v1136
        %v1138 = vpop.f32.mrf.mxu0
        %v1139 = vadd.f32 %v998, %v1138
        %v1140 = vand.u32 %v450, 4294901760
        %1141 = vmatmul.f32.gmra.mxu0 %v1140
        %v1142 = vpop.f32.mrf.mxu0
        %v1143 = vadd.f32 %v1004, %v1142
        %v1144 = vand.u32 %v451, 4294901760
        %1145 = vmatmul.f32.gmra.mxu0 %v1144
        %v1146 = vpop.f32.mrf.mxu0
        %v1147 = vadd.f32 %v1010, %v1146
        %v1148 = vand.u32 %v452, 4294901760
        %1149 = vmatmul.f32.gmra.mxu0 %v1148
        %v1150 = vpop.f32.mrf.mxu0
        %v1151 = vadd.f32 %v1016, %v1150
        %v1152 = vand.u32 %v453, 4294901760
        %1153 = vmatmul.f32.gmra.mxu0 %v1152
        %v1154 = vpop.f32.mrf.mxu0
        %v1155 = vadd.f32 %v1022, %v1154
        %v1156 = vand.u32 %v454, 4294901760
        %1157 = vmatmul.f32.gmra.mxu0 %v1156
        %v1158 = vpop.f32.mrf.mxu0
        %v1159 = vadd.f32 %v1028, %v1158
        %v1160 = vand.u32 %v455, 4294901760
        %1161 = vmatmul.f32.gmra.mxu0 %v1160
        %v1162 = vpop.f32.mrf.mxu0
        %v1163 = vadd.f32 %v1034, %v1162
        %1164 = vdwg.mxu0
        %v1165 = vand.u32 %v351, 4294901760
        %1166 = vmatpush.msra.mxu0 %v1165
        %v1167 = vand.u32 %v350, 4294901760
        %1168 = vmatpush.msra.mxu0 %v1167
        %v1169 = vand.u32 %v349, 4294901760
        %1170 = vmatpush.msra.mxu0 %v1169
        %v1171 = vand.u32 %v348, 4294901760
        %1172 = vmatpush.msra.mxu0 %v1171
        %v1173 = vand.u32 %v347, 4294901760
        %1174 = vmatpush.msra.mxu0 %v1173
        %v1175 = vand.u32 %v346, 4294901760
        %1176 = vmatpush.msra.mxu0 %v1175
        %v1177 = vand.u32 %v345, 4294901760
        %1178 = vmatpush.msra.mxu0 %v1177
        %v1179 = vand.u32 %v344, 4294901760
        %1180 = vmatpush.msra.mxu0 %v1179
        %v1181 = vand.u32 %v343, 4294901760
        %1182 = vmatpush.msra.mxu0 %v1181
        %v1183 = vand.u32 %v342, 4294901760
        %1184 = vmatpush.msra.mxu0 %v1183
        %v1185 = vand.u32 %v341, 4294901760
        %1186 = vmatpush.msra.mxu0 %v1185
        %v1187 = vand.u32 %v340, 4294901760
        %1188 = vmatpush.msra.mxu0 %v1187
        %v1189 = vand.u32 %v339, 4294901760
        %1190 = vmatpush.msra.mxu0 %v1189
        %v1191 = vand.u32 %v338, 4294901760
        %1192 = vmatpush.msra.mxu0 %v1191
        %v1193 = vand.u32 %v337, 4294901760
        %1194 = vmatpush.msra.mxu0 %v1193
        %v1195 = vand.u32 %v336, 4294901760
        %1196 = vmatpush.msra.mxu0 %v1195
        %v1197 = vand.u32 %v440, 4294901760
        %1198 = vmatmul.f32.gmra.mxu0 %v1197
        %v1199 = vpop.f32.mrf.mxu0
        %v1200 = vadd.f32 %v1103, %v1199
        %v1201 = vand.u32 %v441, 4294901760
        %1202 = vmatmul.f32.gmra.mxu0 %v1201
        %v1203 = vpop.f32.mrf.mxu0
        %v1204 = vadd.f32 %v1107, %v1203
        %v1205 = vand.u32 %v442, 4294901760
        %1206 = vmatmul.f32.gmra.mxu0 %v1205
        %v1207 = vpop.f32.mrf.mxu0
        %v1208 = vadd.f32 %v1111, %v1207
        %v1209 = vand.u32 %v443, 4294901760
        %1210 = vmatmul.f32.gmra.mxu0 %v1209
        %v1211 = vpop.f32.mrf.mxu0
        %v1212 = vadd.f32 %v1115, %v1211
        %v1213 = vand.u32 %v444, 4294901760
        %1214 = vmatmul.f32.gmra.mxu0 %v1213
        %v1215 = vpop.f32.mrf.mxu0
        %v1216 = vadd.f32 %v1119, %v1215
        %v1217 = vand.u32 %v445, 4294901760
        %1218 = vmatmul.f32.gmra.mxu0 %v1217
        %v1219 = vpop.f32.mrf.mxu0
        %v1220 = vadd.f32 %v1123, %v1219
        %v1221 = vand.u32 %v446, 4294901760
        %1222 = vmatmul.f32.gmra.mxu0 %v1221
        %v1223 = vpop.f32.mrf.mxu0
        %v1224 = vadd.f32 %v1127, %v1223
        %v1225 = vand.u32 %v447, 4294901760
        %1226 = vmatmul.f32.gmra.mxu0 %v1225
        %v1227 = vpop.f32.mrf.mxu0
        %v1228 = vadd.f32 %v1131, %v1227
        %v1229 = vand.u32 %v448, 4294901760
        %1230 = vmatmul.f32.gmra.mxu0 %v1229
        %v1231 = vpop.f32.mrf.mxu0
        %v1232 = vadd.f32 %v1135, %v1231
        %v1233 = vand.u32 %v449, 4294901760
        %1234 = vmatmul.f32.gmra.mxu0 %v1233
        %v1235 = vpop.f32.mrf.mxu0
        %v1236 = vadd.f32 %v1139, %v1235
        %v1237 = vand.u32 %v450, 4294901760
        %1238 = vmatmul.f32.gmra.mxu0 %v1237
        %v1239 = vpop.f32.mrf.mxu0
        %v1240 = vadd.f32 %v1143, %v1239
        %v1241 = vand.u32 %v451, 4294901760
        %1242 = vmatmul.f32.gmra.mxu0 %v1241
        %v1243 = vpop.f32.mrf.mxu0
        %v1244 = vadd.f32 %v1147, %v1243
        %v1245 = vand.u32 %v452, 4294901760
        %1246 = vmatmul.f32.gmra.mxu0 %v1245
        %v1247 = vpop.f32.mrf.mxu0
        %v1248 = vadd.f32 %v1151, %v1247
        %v1249 = vand.u32 %v453, 4294901760
        %1250 = vmatmul.f32.gmra.mxu0 %v1249
        %v1251 = vpop.f32.mrf.mxu0
        %v1252 = vadd.f32 %v1155, %v1251
        %v1253 = vand.u32 %v454, 4294901760
        %1254 = vmatmul.f32.gmra.mxu0 %v1253
        %v1255 = vpop.f32.mrf.mxu0
        %v1256 = vadd.f32 %v1159, %v1255
        %v1257 = vand.u32 %v455, 4294901760
        %1258 = vmatmul.f32.gmra.mxu0 %v1257
        %v1259 = vpop.f32.mrf.mxu0
        %v1260 = vadd.f32 %v1163, %v1259
        %1261 = vdwg.mxu0
        %p1262 = scmp.eq.s32.totalorder %s39, 0
        // Predicated region
        $region41: #{tpu_custom_call.1} parent=31 // pred_check
          %p1263 = pneg %p1262
        $region42: #{tpu_custom_call.1} parent=31 // pred_check_branch
          %1265 = sbr.rel (%p1263) target = $region44
        $region43: #{tpu_custom_call.1} parent=31 // pred_region
          %1266 = vst [vmem:[%s314] sm:$0xff] %v1200
          %1267 = vst [vmem:[%s314 + $0x8] sm:$0xff] %v1204
          %1268 = vst [vmem:[%s314 + $0x10] sm:$0xff] %v1208
          %1269 = vst [vmem:[%s314 + $0x18] sm:$0xff] %v1212
          %1270 = vst [vmem:[%s314 + $0x20] sm:$0xff] %v1216
          %1271 = vst [vmem:[%s314 + $0x28] sm:$0xff] %v1220
          %1272 = vst [vmem:[%s314 + $0x30] sm:$0xff] %v1224
          %1273 = vst [vmem:[%s314 + $0x38] sm:$0xff] %v1228
          %1274 = vst [vmem:[%s314 + $0x40] sm:$0xff] %v1232
          %1275 = vst [vmem:[%s314 + $0x48] sm:$0xff] %v1236
          %1276 = vst [vmem:[%s314 + $0x50] sm:$0xff] %v1240
          %1277 = vst [vmem:[%s314 + $0x58] sm:$0xff] %v1244
          %1278 = vst [vmem:[%s314 + $0x60] sm:$0xff] %v1248
          %1279 = vst [vmem:[%s314 + $0x68] sm:$0xff] %v1252
          %1280 = vst [vmem:[%s314 + $0x70] sm:$0xff] %v1256
          %1281 = vst [vmem:[%s314 + $0x78] sm:$0xff] %v1260
        $region44: #{tpu_custom_call.1} parent=31 // pred_fallthru
          _
        %p1282 = scmp.gt.s32.totalorder %s39, 0
        // Predicated region
        $region45: #{tpu_custom_call.1} parent=31 // pred_check
          %p1283 = pneg %p1282
        $region46: #{tpu_custom_call.1} parent=31 // pred_check_branch
          %1285 = sbr.rel (%p1283) target = $region48
        $region47: #{tpu_custom_call.1} parent=31 // pred_region
          %v1286 = vld [vmem:[%s314] sm:$0xff]
          %v1287 = vld [vmem:[%s314 + $0x8] sm:$0xff]
          %v1288 = vld [vmem:[%s314 + $0x10] sm:$0xff]
          %v1289 = vld [vmem:[%s314 + $0x18] sm:$0xff]
          %v1290 = vld [vmem:[%s314 + $0x20] sm:$0xff]
          %v1291 = vld [vmem:[%s314 + $0x28] sm:$0xff]
          %v1292 = vld [vmem:[%s314 + $0x30] sm:$0xff]
          %v1293 = vld [vmem:[%s314 + $0x38] sm:$0xff]
          %v1294 = vld [vmem:[%s314 + $0x40] sm:$0xff]
          %v1295 = vld [vmem:[%s314 + $0x48] sm:$0xff]
          %v1296 = vld [vmem:[%s314 + $0x50] sm:$0xff]
          %v1297 = vld [vmem:[%s314 + $0x58] sm:$0xff]
          %v1298 = vld [vmem:[%s314 + $0x60] sm:$0xff]
          %v1299 = vld [vmem:[%s314 + $0x68] sm:$0xff]
          %v1300 = vld [vmem:[%s314 + $0x70] sm:$0xff]
          %v1301 = vld [vmem:[%s314 + $0x78] sm:$0xff]
          %v1302 = vadd.f32 %v1286, %v1200
          %v1303 = vadd.f32 %v1287, %v1204
          %v1304 = vadd.f32 %v1288, %v1208
          %v1305 = vadd.f32 %v1289, %v1212
          %v1306 = vadd.f32 %v1290, %v1216
          %v1307 = vadd.f32 %v1291, %v1220
          %v1308 = vadd.f32 %v1292, %v1224
          %v1309 = vadd.f32 %v1293, %v1228
          %v1310 = vadd.f32 %v1294, %v1232
          %v1311 = vadd.f32 %v1295, %v1236
          %v1312 = vadd.f32 %v1296, %v1240
          %v1313 = vadd.f32 %v1297, %v1244
          %v1314 = vadd.f32 %v1298, %v1248
          %v1315 = vadd.f32 %v1299, %v1252
          %v1316 = vadd.f32 %v1300, %v1256
          %v1317 = vadd.f32 %v1301, %v1260
          %1318 = vst [vmem:[%s314] sm:$0xff] %v1302
          %1319 = vst [vmem:[%s314 + $0x8] sm:$0xff] %v1303
          %1320 = vst [vmem:[%s314 + $0x10] sm:$0xff] %v1304
          %1321 = vst [vmem:[%s314 + $0x18] sm:$0xff] %v1305
          %1322 = vst [vmem:[%s314 + $0x20] sm:$0xff] %v1306
          %1323 = vst [vmem:[%s314 + $0x28] sm:$0xff] %v1307
          %1324 = vst [vmem:[%s314 + $0x30] sm:$0xff] %v1308
          %1325 = vst [vmem:[%s314 + $0x38] sm:$0xff] %v1309
          %1326 = vst [vmem:[%s314 + $0x40] sm:$0xff] %v1310
          %1327 = vst [vmem:[%s314 + $0x48] sm:$0xff] %v1311
          %1328 = vst [vmem:[%s314 + $0x50] sm:$0xff] %v1312
          %1329 = vst [vmem:[%s314 + $0x58] sm:$0xff] %v1313
          %1330 = vst [vmem:[%s314 + $0x60] sm:$0xff] %v1314
          %1331 = vst [vmem:[%s314 + $0x68] sm:$0xff] %v1315
          %1332 = vst [vmem:[%s314 + $0x70] sm:$0xff] %v1316
          %1333 = vst [vmem:[%s314 + $0x78] sm:$0xff] %v1317
        $region48: #{tpu_custom_call.1} parent=31 // pred_fallthru
          _
        %s1334 = sand.u32 %s163, 1
        %s1335 = scalar_lea.sflag [#allocation6], %s1334
        %s1336 = sand.u32 %s163, 1
        %s1337 = smul.addr %s1336, 128
        %s1338 = scalar_lea.vmem [#allocation9], %s1337
        // Predicated region
        $region49: #{tpu_custom_call.1} parent=31 // pred_check
          %p1339 = pneg %p173
        $region50: #{tpu_custom_call.1} parent=31 // pred_check_branch
          %1341 = sbr.rel (%p1339) target = $region52
        $region51: #{tpu_custom_call.1} parent=31 // pred_region
          %s1342 = smul.u32 16, %s38
          %1344 = vsyncadd %s1335, 0
          %s1345 = smul.addr %s37, 16
          %s1346 = sadd.s32 %s1342, %s1345
          %s1347 = smul.addr %s1346, 8
          %s1348 = scalar_lea.hbm %s4, %s1347
          %s1349 = sshll.u32 %s1338, 4
          %s1350 = int_to_ptr.vmem [resolvable:$true] %s1349
          %s1351 = sshll.u32 %s1348, 4
          %s1352 = int_to_ptr.hbm [resolvable:$true] %s1351
          %1357 = dma.vmem_to_hbm [thread:$0]  %s1350, 2048, %s1352, %s1335, 128, 128, 8
        $region52: #{tpu_custom_call.1} parent=31 // pred_fallthru
          _
      $region32: #{tpu_custom_call.1} parent=5 // pred_fallthru
        _
      %p1358 = scmp.le.s32.totalorder 2, %s27
      // Predicated region
      $region53: #{tpu_custom_call.1} parent=5 // pred_check
        %p1359 = pneg %p1358
      $region54: #{tpu_custom_call.1} parent=5 // pred_check_branch
        %1361 = sbr.rel (%p1359) target = $region56
      $region55: #{tpu_custom_call.1} parent=5 // pred_region
        %s1362 = ssub.s32 %s27, 2
        // Predicated region
        $region57: #{tpu_custom_call.1} parent=55 // pred_check
          %p1363 = pneg %p179
        $region58: #{tpu_custom_call.1} parent=55 // pred_check_branch
          %1365 = sbr.rel (%p1363) target = $region60
        $region59: #{tpu_custom_call.1} parent=55 // pred_region
          %s1366 = sand.u32 %s164, 1
          %s1367 = scalar_lea.sflag [#allocation6], %s1366
          %s1368 = sand.u32 %s164, 1
          %s1369 = smul.addr %s1368, 128
          %s1370 = scalar_lea.vmem [#allocation9], %s1369
          %1372 = dma.done %s1367, 2048
        $region60: #{tpu_custom_call.1} parent=55 // pred_fallthru
          _
      $region56: #{tpu_custom_call.1} parent=5 // pred_fallthru
        _
    $region6: #{tpu_custom_call.1} parent=1 // loop_footer
      %s31 = sadd.s32 1, %s27
    $region7: #{tpu_custom_call.1} parent=1 // loop_footer_branch
      %26 = sbr.rel target = $region3
    $region8: #{tpu_custom_call.1} parent=1 // loop_exit
      _
    %1373 = vsyncpa [#allocation5], 1
    %s1374 = scalar_lea.sflag [#allocation5], 1
    %1375 = vsyncpa %s1374, 1
    %1376 = vsyncpa [#allocation8], 1
    %s1377 = scalar_lea.sflag [#allocation8], 1
    %1378 = vsyncpa %s1377, 1
    %1379 = vsyncpa [#allocation6], 1
    %s1380 = scalar_lea.sflag [#allocation6], 1
    %1381 = vsyncpa %s1380, 1

</llo_original>
